<compile_context>
chip_gen: v5e
topology: v5e:2x2
jax: 0.10.0
libtpu: 0.0.40
codegen_flags: <defaults>
</compile_context>

<pallas_src>
import functools

import jax
import jax.numpy as jnp
from jax.experimental import pallas as pl
from jax.experimental.pallas import tpu as pltpu


LANE = 128        # TPU lane width: class dim padded to a multiple -> unmasked vst
SUBLANE = 8       # minimum sublane granularity for the batch tile
TB_TARGET = 256   # batch rows per grid step; comfortably inside v7x's 64 MiB VMEM


def _round_up(n, m):
    return ((n + m - 1) // m) * m


# ----------------------------- kernels ------------------------------------ #

def _vit_head_kernel_with_rep(cls_ref, wr_ref, br_ref, wc_ref, bc_ref, o_ref):
    """CLS features -> representation Linear -> classifier Linear (fused).

    No nonlinearity between the two dots, matching ColossalAI ViTHead.forward.
    """
    cls = cls_ref[...]                                              # [TB, D]
    h = jnp.dot(cls, wr_ref[...],
                preferred_element_type=jnp.float32)                 # f32 accum
    h = h + br_ref[...].astype(jnp.float32)                         # [TB, R]
    h = h.astype(wc_ref.dtype)                                      # real bf16 narrow when params are bf16
    out = jnp.dot(h, wc_ref[...],
                  preferred_element_type=jnp.float32)               # f32 accum
    out = out + bc_ref[...].astype(jnp.float32)                     # [TB, C_pad]
    o_ref[...] = out.astype(o_ref.dtype)


def _vit_head_kernel_no_rep(cls_ref, wc_ref, bc_ref, o_ref):
    """CLS features -> classifier Linear only (representation_size=None)."""
    cls = cls_ref[...]                                              # [TB, D]
    out = jnp.dot(cls, wc_ref[...],
                  preferred_element_type=jnp.float32)
    out = out + bc_ref[...].astype(jnp.float32)
    o_ref[...] = out.astype(o_ref.dtype)


# ----------------------------- wrapper ------------------------------------ #

@functools.partial(jax.jit, static_argnames=("has_representation",))
def vit_head_forward(x, params, has_representation=True):
    """x: [B, S, D].  params: dict of (pre-transposed, [in, out]) weights."""
    B, S, D = x.shape
    dtype = x.dtype
    itemsize = x.dtype.itemsize

    # --- CLS token only: never DMA the full [B, S, D] activation into VMEM ---
    cls = x[:, 0, :]                                                # [B, D]

    # --- batch tiling: pipelined, megacore-shardable grid axis ---------------
    TB = min(TB_TARGET, _round_up(B, SUBLANE))
    B_pad = _round_up(B, TB)
    if B_pad != B:
        cls = jnp.pad(cls, ((0, B_pad - B), (0, 0)))
    grid = (B_pad // TB,)

    # --- lane-dense output: pad classes to a 128-lane multiple ---------------
    w_cls = params["w_cls"]                                         # [R_or_D, C]
    b_cls = params["b_cls"]                                         # [1, C]
    C = w_cls.shape[1]
    C_pad = _round_up(C, LANE)
    if C_pad != C:
        w_cls = jnp.pad(w_cls, ((0, 0), (0, C_pad - C)))
        b_cls = jnp.pad(b_cls, ((0, 0), (0, C_pad - C)))

    out_shape = jax.ShapeDtypeStruct((B_pad, C_pad), dtype)
    cls_spec = pl.BlockSpec((TB, D), lambda i: (i, 0))
    out_spec = pl.BlockSpec((TB, C_pad), lambda i: (i, 0))
    compiler_params = pltpu.CompilerParams(
        dimension_semantics=("parallel",))   # shards grid steps across both TCs on v7x

    if has_representation:
        w_rep = params["w_rep"]                                     # [D, R]
        b_rep = params["b_rep"]                                     # [1, R]
        R = w_rep.shape[1]
        cost = pl.CostEstimate(
            flops=2 * B_pad * (D * R + R * C_pad),
            transcendentals=0,
            bytes_accessed=(B_pad * D + D * R + R + R * C_pad + C_pad
                            + B_pad * C_pad) * itemsize)
        out = pl.pallas_call(
            _vit_head_kernel_with_rep,
            out_shape=out_shape,
            grid_spec=pl.GridSpec(
                grid=grid,
                in_specs=[
                    cls_spec,
                    pl.BlockSpec((D, R), lambda i: (0, 0)),      # VMEM-resident
                    pl.BlockSpec((1, R), lambda i: (0, 0)),
                    pl.BlockSpec((R, C_pad), lambda i: (0, 0)),  # VMEM-resident
                    pl.BlockSpec((1, C_pad), lambda i: (0, 0)),
                ],
                out_specs=out_spec,
            ),
            compiler_params=compiler_params,
            cost_estimate=cost,
        )(cls, w_rep, b_rep, w_cls, b_cls)
    else:
        cost = pl.CostEstimate(
            flops=2 * B_pad * D * C_pad,
            transcendentals=0,
            bytes_accessed=(B_pad * D + D * C_pad + C_pad
                            + B_pad * C_pad) * itemsize)
        out = pl.pallas_call(
            _vit_head_kernel_no_rep,
            out_shape=out_shape,
            grid_spec=pl.GridSpec(
                grid=grid,
                in_specs=[
                    cls_spec,
                    pl.BlockSpec((D, C_pad), lambda i: (0, 0)),  # VMEM-resident
                    pl.BlockSpec((1, C_pad), lambda i: (0, 0)),
                ],
                out_specs=out_spec,
            ),
            compiler_params=compiler_params,
            cost_estimate=cost,
        )(cls, w_cls, b_cls)

    return out[:B, :C]


# ----------------------- deterministic param init ------------------------- #

def init_vit_head_params(key, dim, num_classes, representation_size=None,
                         dtype=jnp.float32):
    """Kaiming-uniform-ish weights / uniform biases, deterministic from `key`.

    PyTorch Linear stores weight as [out, in]; we store the transpose [in, out]
    so the kernel computes y = x @ W + b directly.
    """
    params = {}
    k1, k2, k3, k4 = jax.random.split(key, 4)
    rep = representation_size if representation_size else dim

    if representation_size:
        bound_w = (6.0 / dim) ** 0.5            # ~kaiming_uniform(a=sqrt(5))
        params["w_rep"] = jax.random.uniform(
            k1, (dim, rep), dtype, minval=-bound_w, maxval=bound_w)
        params["b_rep"] = jax.random.uniform(
            k2, (1, rep), dtype, minval=-0.1, maxval=0.1)

    bound_c = (6.0 / rep) ** 0.5
    params["w_cls"] = jax.random.uniform(
        k3, (rep, num_classes), dtype, minval=-bound_c, maxval=bound_c)
    params["b_cls"] = jax.random.uniform(
        k4, (1, num_classes), dtype, minval=-0.1, maxval=0.1)
    return params


# ------------------------------- main -------------------------------------- #

if __name__ == "__main__":
    B, S, D = 2, 8, 32          # batch, seq (incl. CLS token), hidden dim
    REP = 32                    # representation_size
    NUM_CLASSES = 10

    key = jax.random.PRNGKey(0)
    kx, kp, kp2 = jax.random.split(key, 3)
    x = jax.random.normal(kx, (B, S, D), dtype=jnp.float32)

    # --- path 1: with representation layer (f32) ---
    params = init_vit_head_params(kp, D, NUM_CLASSES, representation_size=REP)
    out = jax.block_until_ready(vit_head_forward(x, params,
                                                 has_representation=True))
    cls = x[:, 0]
    ref = (cls @ params["w_rep"] + params["b_rep"]) @ params["w_cls"] + params["b_cls"]
    assert out.shape == (B, NUM_CLASSES), out.shape
    assert jnp.allclose(out, ref, atol=1e-5, rtol=1e-5), \
        float(jnp.max(jnp.abs(out - ref)))

    # --- path 2: representation_size=None (classifier only, f32) ---
    params_nr = init_vit_head_params(kp2, D, NUM_CLASSES, representation_size=None)
    out_nr = jax.block_until_ready(vit_head_forward(x, params_nr,
                                                    has_representation=False))
    ref_nr = cls @ params_nr["w_cls"] + params_nr["b_cls"]
    assert out_nr.shape == (B, NUM_CLASSES), out_nr.shape
    assert jnp.allclose(out_nr, ref_nr, atol=1e-5, rtol=1e-5), \
        float(jnp.max(jnp.abs(out_nr - ref_nr)))

    # --- path 3: bf16 activations + weights (f32 accumulation inside kernel) ---
    x_bf = x.astype(jnp.bfloat16)
    params_bf = jax.tree_util.tree_map(lambda p: p.astype(jnp.bfloat16), params)
    out_bf = jax.block_until_ready(vit_head_forward(x_bf, params_bf,
                                                    has_representation=True))
    assert out_bf.shape == (B, NUM_CLASSES), out_bf.shape
    assert bool(jnp.all(jnp.isfinite(out_bf.astype(jnp.float32))))

    print("KERNEL_OK")
</pallas_src>

<mosaic_0001>
module attributes {stable_mosaic.version = 11 : i64} {
  func.func @_vit_head_kernel_with_rep(%arg0: i32, %arg1: memref<8x32xf32, #tpu.memory_space<vmem>>, %arg2: memref<32x32xf32, #tpu.memory_space<vmem>>, %arg3: memref<1x32xf32, #tpu.memory_space<vmem>>, %arg4: memref<32x128xf32, #tpu.memory_space<vmem>>, %arg5: memref<1x128xf32, #tpu.memory_space<vmem>>, %arg6: memref<8x128xf32, #tpu.memory_space<vmem>>) attributes {dimension_semantics = [#tpu.dimension_semantics<parallel>], iteration_bounds = array<i64: 1>, scalar_prefetch = 0 : i64, scratch_operands = 0 : i64, tpu.core_type = #tpu.core_type<tc>, window_params = [{transform_indices = @transform_0, window_bounds = array<i64: 8, 32>}, {pipeline_mode = #tpu.pipeline_mode<synchronous>, transform_indices = @transform_1, window_bounds = array<i64: 32, 32>}, {pipeline_mode = #tpu.pipeline_mode<synchronous>, transform_indices = @transform_2, window_bounds = array<i64: 1, 32>}, {pipeline_mode = #tpu.pipeline_mode<synchronous>, transform_indices = @transform_3, window_bounds = array<i64: 32, 128>}, {pipeline_mode = #tpu.pipeline_mode<synchronous>, transform_indices = @transform_4, window_bounds = array<i64: 1, 128>}, {transform_indices = @transform_5, window_bounds = array<i64: 8, 128>}]} {
    %c0 = arith.constant 0 : index
    %c0_0 = arith.constant 0 : index
    %0 = vector.load %arg1[%c0, %c0_0] : memref<8x32xf32, #tpu.memory_space<vmem>>, vector<8x32xf32>
    %c0_1 = arith.constant 0 : index
    %c0_2 = arith.constant 0 : index
    %1 = vector.load %arg2[%c0_1, %c0_2] : memref<32x32xf32, #tpu.memory_space<vmem>>, vector<32x32xf32>
    %cst = arith.constant dense<0.000000e+00> : vector<8x32xf32>
    %2 = tpu.matmul %0, %1, %cst {dimension_numbers = #tpu.dot_dimension_numbers<[1], [0], [0], [1], [0, 0, 1, 1], [], []>} : vector<8x32xf32>, vector<32x32xf32>, vector<8x32xf32> -> vector<8x32xf32>
    %c0_3 = arith.constant 0 : index
    %c0_4 = arith.constant 0 : index
    %3 = vector.load %arg3[%c0_3, %c0_4] : memref<1x32xf32, #tpu.memory_space<vmem>>, vector<1x32xf32>
    %4 = vector.broadcast %3 : vector<1x32xf32> to vector<8x32xf32>
    %5 = arith.addf %2, %4 : vector<8x32xf32>
    %c0_5 = arith.constant 0 : index
    %c0_6 = arith.constant 0 : index
    %6 = vector.load %arg4[%c0_5, %c0_6] : memref<32x128xf32, #tpu.memory_space<vmem>>, vector<32x128xf32>
    %cst_7 = arith.constant dense<0.000000e+00> : vector<8x128xf32>
    %7 = tpu.matmul %5, %6, %cst_7 {dimension_numbers = #tpu.dot_dimension_numbers<[1], [0], [0], [1], [0, 0, 1, 1], [], []>} : vector<8x32xf32>, vector<32x128xf32>, vector<8x128xf32> -> vector<8x128xf32>
    %c0_8 = arith.constant 0 : index
    %c0_9 = arith.constant 0 : index
    %8 = vector.load %arg5[%c0_8, %c0_9] : memref<1x128xf32, #tpu.memory_space<vmem>>, vector<1x128xf32>
    %9 = vector.broadcast %8 : vector<1x128xf32> to vector<8x128xf32>
    %10 = arith.addf %7, %9 : vector<8x128xf32>
    %c0_10 = arith.constant 0 : index
    %c0_11 = arith.constant 0 : index
    %11 = vector.load %arg6[%c0_10, %c0_11] : memref<8x128xf32, #tpu.memory_space<vmem>>, vector<8x128xf32>
    tpu.vector_store %arg6[%c0_10, %c0_11], %10 {strides = array<i32>} : memref<8x128xf32, #tpu.memory_space<vmem>>, vector<8x128xf32>,
    return
  }
  func.func @transform_0(%arg0: i32) -> (i32, i32) {
    %c0_i32 = arith.constant 0 : i32
    %c0_i32_0 = arith.constant 0 : i32
    return %arg0, %c0_i32 : i32, i32
  }
  func.func @transform_1(%arg0: i32) -> (i32, i32) {
    %c0_i32 = arith.constant 0 : i32
    %c0_i32_0 = arith.constant 0 : i32
    %c0_i32_1 = arith.constant 0 : i32
    return %c0_i32, %c0_i32_0 : i32, i32
  }
  func.func @transform_2(%arg0: i32) -> (i32, i32) {
    %c0_i32 = arith.constant 0 : i32
    %c0_i32_0 = arith.constant 0 : i32
    %c0_i32_1 = arith.constant 0 : i32
    return %c0_i32, %c0_i32_0 : i32, i32
  }
  func.func @transform_3(%arg0: i32) -> (i32, i32) {
    %c0_i32 = arith.constant 0 : i32
    %c0_i32_0 = arith.constant 0 : i32
    %c0_i32_1 = arith.constant 0 : i32
    return %c0_i32, %c0_i32_0 : i32, i32
  }
  func.func @transform_4(%arg0: i32) -> (i32, i32) {
    %c0_i32 = arith.constant 0 : i32
    %c0_i32_0 = arith.constant 0 : i32
    %c0_i32_1 = arith.constant 0 : i32
    return %c0_i32, %c0_i32_0 : i32, i32
  }
  func.func @transform_5(%arg0: i32) -> (i32, i32) {
    %c0_i32 = arith.constant 0 : i32
    %c0_i32_0 = arith.constant 0 : i32
    return %arg0, %c0_i32 : i32, i32
  }
}

</mosaic_0001>

<llo_original>
// kernel: vit_head_forward.1
$region0: #{vit_head_forward.1}
  #allocation0 [shape = 'u32[]', space=smem, size = 0x4, offset = 0x4, fixed_abs, tag = 'smem constant byte address 0x4 - core index']
  #allocation1 [shape = 'u32[72,128]{1,0:T(1,128)}', space=vmem, size = 0x9000, scoped, tag = 'internal scratch']
  %s0 = inlined_call_operand.vmem [shape: f32[8,32], index: 0, kind: input, shape index: {}]
  %s1 = inlined_call_operand.vmem [shape: f32[32,32], index: 1, kind: input, shape index: {}]
  %s2 = inlined_call_operand.vmem [shape: f32[1,32], index: 2, kind: input, shape index: {}]
  %s3 = inlined_call_operand.vmem [shape: f32[32,128], index: 3, kind: input, shape index: {}]
  %s4 = inlined_call_operand.vmem [shape: f32[1,128], index: 4, kind: input, shape index: {}]
  %s5 = inlined_call_operand.vmem [shape: f32[8,128], index: 5, kind: output, shape index: {}]
  %s6 = sld [smem:[#allocation0]]
  $region30: #{vit_head_forward.1} parent=0
    _
  %s8 = ssub.s32 1, %s6
  %s9 = scalar_select 0, %s8, %s6
  // Predicated region
  $region2: #{vit_head_forward.1} parent=0 // pred_check
    _
  $region3: #{vit_head_forward.1} parent=0 // pred_check_branch
    %11 = sbr.rel (0) target = $region5
  $region4: #{vit_head_forward.1} parent=0 // pred_region
    _
  $region5: #{vit_head_forward.1} parent=0 // pred_fallthru
    _
  // Predicated region
  $region6: #{vit_head_forward.1} parent=0 // pred_check
    _
  $region7: #{vit_head_forward.1} parent=0 // pred_check_branch
    %13 = sbr.rel (0) target = $region9
  $region8: #{vit_head_forward.1} parent=0 // pred_region
    _
  $region9: #{vit_head_forward.1} parent=0 // pred_fallthru
    _
  // Predicated region
  $region10: #{vit_head_forward.1} parent=0 // pred_check
    _
  $region11: #{vit_head_forward.1} parent=0 // pred_check_branch
    %15 = sbr.rel (0) target = $region13
  $region12: #{vit_head_forward.1} parent=0 // pred_region
    _
  $region13: #{vit_head_forward.1} parent=0 // pred_fallthru
    _
  // Predicated region
  $region14: #{vit_head_forward.1} parent=0 // pred_check
    _
  $region15: #{vit_head_forward.1} parent=0 // pred_check_branch
    %17 = sbr.rel (0) target = $region17
  $region16: #{vit_head_forward.1} parent=0 // pred_region
    _
  $region17: #{vit_head_forward.1} parent=0 // pred_fallthru
    _
  // Predicated region
  $region18: #{vit_head_forward.1} parent=0 // pred_check
    _
  $region19: #{vit_head_forward.1} parent=0 // pred_check_branch
    %19 = sbr.rel (0) target = $region21
  $region20: #{vit_head_forward.1} parent=0 // pred_region
    _
  $region21: #{vit_head_forward.1} parent=0 // pred_fallthru
    _
  %v20 = vld [vmem:[%s0] sm:$0xff]
  %v21 = vld [vmem:[%s1] sm:$0xff]
  %v22 = vld [vmem:[%s1 + $0x8] sm:$0xff]
  %v23 = vld [vmem:[%s1 + $0x10] sm:$0xff]
  %v24 = vld [vmem:[%s1 + $0x18] sm:$0xff]
  %v25 = vld [vmem:[%s2] sm:$0x1]
  %v27 = vperm.slane %v25, 0
  %vm29 = vcmask 261120
  %v31 = vsel %vm29, %v20, 0
  %33 = vmatpush.msra.mxu0 0.0
  %34 = vmatpush.msra.mxu0 0.0
  %35 = vmatpush.msra.mxu0 0.0
  %36 = vmatpush.msra.mxu0 0.0
  %37 = vmatpush.msra.mxu0 0.0
  %38 = vmatpush.msra.mxu0 0.0
  %39 = vmatpush.msra.mxu0 0.0
  %40 = vmatpush.msra.mxu0 0.0
  %41 = vmatpush.msra.mxu0 0.0
  %42 = vmatpush.msra.mxu0 0.0
  %43 = vmatpush.msra.mxu0 0.0
  %44 = vmatpush.msra.mxu0 0.0
  %45 = vmatpush.msra.mxu0 %v24
  %46 = vmatpush.msra.mxu0 %v23
  %47 = vmatpush.msra.mxu0 %v22
  %48 = vmatpush.msra.mxu0 %v21
  %49 = vmatmul.f32.gmra.mxu0 %v31
  %v50 = vpop.f32.mrf.mxu0
  %v51 = vadd.f32 %v27, %v50
  %52 = vdwg.mxu0
  %v53 = vld [vmem:[%s3] sm:$0xff]
  %v54 = vld [vmem:[%s3 + $0x8] sm:$0xff]
  %v55 = vld [vmem:[%s3 + $0x10] sm:$0xff]
  %v56 = vld [vmem:[%s3 + $0x18] sm:$0xff]
  %v57 = vld [vmem:[%s4] sm:$0x1]
  %v59 = vperm.slane %v57, 0
  %v62 = vsel %vm29, %v51, 0
  %64 = vmatpush.msra.mxu0 0.0
  %65 = vmatpush.msra.mxu0 0.0
  %66 = vmatpush.msra.mxu0 0.0
  %67 = vmatpush.msra.mxu0 0.0
  %68 = vmatpush.msra.mxu0 0.0
  %69 = vmatpush.msra.mxu0 0.0
  %70 = vmatpush.msra.mxu0 0.0
  %71 = vmatpush.msra.mxu0 0.0
  %72 = vmatpush.msra.mxu0 0.0
  %73 = vmatpush.msra.mxu0 0.0
  %74 = vmatpush.msra.mxu0 0.0
  %75 = vmatpush.msra.mxu0 0.0
  %76 = vmatpush.msra.mxu0 %v56
  %77 = vmatpush.msra.mxu0 %v55
  %78 = vmatpush.msra.mxu0 %v54
  %79 = vmatpush.msra.mxu0 %v53
  %80 = vmatmul.f32.gmra.mxu0 %v62
  %v81 = vpop.f32.mrf.mxu0
  %v82 = vadd.f32 %v59, %v81
  %83 = vdwg.mxu0
  %84 = vst [vmem:[%s5] sm:$0xff] %v82
  // Predicated region
  $region22: #{vit_head_forward.1} parent=0 // pred_check
    _
  $region23: #{vit_head_forward.1} parent=0 // pred_check_branch
    %86 = sbr.rel (0) target = $region25
  $region24: #{vit_head_forward.1} parent=0 // pred_region
    _
  $region25: #{vit_head_forward.1} parent=0 // pred_fallthru
    _
  // Predicated region
  $region26: #{vit_head_forward.1} parent=0 // pred_check
    _
  $region27: #{vit_head_forward.1} parent=0 // pred_check_branch
    %88 = sbr.rel (0) target = $region29
  $region28: #{vit_head_forward.1} parent=0 // pred_region
    _
  $region29: #{vit_head_forward.1} parent=0 // pred_fallthru
    _

</llo_original>
